<compile_context>
chip_gen: v5e
topology: v5e:2x2
jax: 0.10.0
libtpu: 0.0.40
codegen_flags: <defaults>
</compile_context>

<pallas_src>
import functools

import jax
import jax.numpy as jnp
from jax import lax
from jax.experimental import pallas as pl
from jax.experimental.pallas import tpu as pltpu

MIN_DEPTH = 0.001
LANES = 128
SUBLANES = 8
MAX_BLOCK_ROWS = 8192          # (8192,128) f32 tile = 4 MiB per input per buffer
NUM_CORE_SPLITS = 2            # leading "parallel" axis (2 TCs on v7x; no-op elsewhere)
VMEM_LIMIT_BYTES = 40 << 20    # > v5e's 16 MiB scoped default, < v7x's 64 MiB physical


def _stats_kernel(pred_ref, gt_ref, max_ref, cnt_ref, *,
                  rows, block_rows, blocks_per_split, total_blocks, full_blocks,
                  needs_row_mask):
    """Per-lane (8,128)-granular masked max(|pred-gt|) and valid-element count."""
    i = pl.program_id(1)

    @pl.when(i == 0)
    def _():
        max_ref[...] = jnp.zeros_like(max_ref)   # err >= 0, so 0 is a valid identity
        cnt_ref[...] = jnp.zeros_like(cnt_ref)

    def accumulate(extra_mask):
        pred = pred_ref[...].astype(jnp.float32)
        gt = gt_ref[...].astype(jnp.float32)
        valid = gt > MIN_DEPTH
        if extra_mask is not None:
            valid = jnp.logical_and(valid, extra_mask)
        err = jnp.where(valid, jnp.abs(pred - gt), 0.0)
        # (block_rows,128) -> (block_rows//8, 8, 128): layout-free split of the
        # sublane-major axis; reduce over axis 0 is pure VALU (no XLU).
        err8 = err.reshape(-1, SUBLANES, LANES)
        cnt8 = valid.astype(jnp.int32).reshape(-1, SUBLANES, LANES)
        max_ref[...] = jnp.maximum(max_ref[...], jnp.max(err8, axis=0)[None])
        cnt_ref[...] += jnp.sum(cnt8, axis=0)[None]

    if not needs_row_mask:
        accumulate(None)                         # hot path: no iota / row compare
    else:
        blk = pl.program_id(0) * blocks_per_split + i

        @pl.when(blk < full_blocks)              # full blocks: no row mask needed
        def _():
            accumulate(None)

        @pl.when(jnp.logical_and(blk >= full_blocks, blk < total_blocks))
        def _():                                 # ragged tail block only
            row_ids = blk * block_rows + lax.broadcasted_iota(
                jnp.int32, (block_rows, LANES), 0)
            accumulate(row_ids < rows)
        # blk >= total_blocks: clamped duplicate (overflow) block -> skip compute.


def _berhu_sum_kernel(maxin_ref, cntin_ref, pred_ref, gt_ref, sum_ref, scal_ref, *,
                      rows, block_rows, blocks_per_split, total_blocks, full_blocks,
                      needs_row_mask, delta):
    """Masked BerHu sum; c and 1/n_valid derived in-kernel from pass-1 partials."""
    i = pl.program_id(1)

    @pl.when(i == 0)
    def _():
        # Fold the inter-pass scalar glue: global max / count reduce, c, 1/(2c),
        # c/2, 1/n_valid -- computed once per split, stored as SMEM scalars.
        max_err = jnp.max(maxin_ref[...])
        n_valid = jnp.sum(cntin_ref[...]).astype(jnp.float32)
        c = jnp.float32(delta) * max_err
        c_safe = jnp.maximum(c, jnp.float32(1e-30))   # guard c==0 (quad never taken then)
        scal_ref[0] = c                                # threshold
        scal_ref[1] = 0.5 / c_safe                     # 1/(2c)
        scal_ref[2] = 0.5 * c                          # c/2
        scal_ref[3] = 1.0 / n_valid                    # 1/|mask| (NaN result if no valid px)
        sum_ref[...] = jnp.zeros_like(sum_ref)

    def accumulate(extra_mask):
        c = scal_ref[0]
        inv_2c = scal_ref[1]
        c_half = scal_ref[2]
        pred = pred_ref[...].astype(jnp.float32)
        gt = gt_ref[...].astype(jnp.float32)
        valid = gt > MIN_DEPTH
        if extra_mask is not None:
            valid = jnp.logical_and(valid, extra_mask)
        # Invalid entries get err=0, and 0 > c is never true (c >= 0), so no
        # second where is needed for the sum.
        err = jnp.where(valid, jnp.abs(pred - gt), 0.0)
        loss = jnp.where(err > c, err * err * inv_2c + c_half, err)
        sum_ref[...] += jnp.sum(loss.reshape(-1, SUBLANES, LANES), axis=0)[None]

    if not needs_row_mask:
        accumulate(None)
    else:
        blk = pl.program_id(0) * blocks_per_split + i

        @pl.when(blk < full_blocks)
        def _():
            accumulate(None)

        @pl.when(jnp.logical_and(blk >= full_blocks, blk < total_blocks))
        def _():
            row_ids = blk * block_rows + lax.broadcasted_iota(
                jnp.int32, (block_rows, LANES), 0)
            accumulate(row_ids < rows)

    @pl.when(i == pl.num_programs(1) - 1)
    def _():
        # Fold the mean's divide: emit already-normalized per-lane partials.
        sum_ref[...] = sum_ref[...] * scal_ref[3]


def berhu_loss(prediction, gt, epoch=0, delta=0.05):
    """Pallas implementation of Berhu_loss.forward (epoch is unused, as in reference)."""
    assert prediction.shape == gt.shape
    n = prediction.size

    pred_flat = prediction.reshape(-1)
    gt_flat = gt.reshape(-1)

    # Only pad the sub-(8*128) remainder (rare; zero gt => masked out).  Keeping
    # rows a multiple of 8 makes every block (8,128)-tileable so the full-vreg
    # accumulator reshape is layout-free.
    chunk = SUBLANES * LANES
    rem = n % chunk
    if rem:
        pad = chunk - rem
        pred_flat = jnp.pad(pred_flat, (0, pad))
        gt_flat = jnp.pad(gt_flat, (0, pad))
    rows = pred_flat.size // LANES

    pred2d = pred_flat.reshape(rows, LANES)
    gt2d = gt_flat.reshape(rows, LANES)

    block_rows = min(MAX_BLOCK_ROWS, rows)           # full-dim block if array is small
    total_blocks = pl.cdiv(rows, block_rows)
    splits = min(NUM_CORE_SPLITS, total_blocks)
    blocks_per_split = pl.cdiv(total_blocks, splits)
    full_blocks = rows // block_rows                 # blocks needing no row mask
    needs_row_mask = (rows % block_rows != 0) or (splits * blocks_per_split != total_blocks)
    grid = (splits, blocks_per_split)

    def data_map(s, i):
        # Clamp so a split's overflow iterations never DMA past the array; those
        # iterations skip all compute in-kernel.
        return (jnp.minimum(s * blocks_per_split + i, total_blocks - 1), 0)

    data_spec = pl.BlockSpec((block_rows, LANES), data_map)
    acc_spec = pl.BlockSpec((1, SUBLANES, LANES), lambda s, i: (s, 0, 0))
    stat_spec = pl.BlockSpec((splits, SUBLANES, LANES), lambda s, i: (0, 0, 0))
    cparams = pltpu.CompilerParams(
        dimension_semantics=("parallel", "arbitrary"),
        vmem_limit_bytes=VMEM_LIMIT_BYTES)

    static = dict(rows=rows, block_rows=block_rows, blocks_per_split=blocks_per_split,
                  total_blocks=total_blocks, full_blocks=full_blocks,
                  needs_row_mask=needs_row_mask)

    # Pass 1: per-lane masked max + valid count (per split).
    max_out, cnt_out = pl.pallas_call(
        functools.partial(_stats_kernel, **static),
        out_shape=(jax.ShapeDtypeStruct((splits, SUBLANES, LANES), jnp.float32),
                   jax.ShapeDtypeStruct((splits, SUBLANES, LANES), jnp.int32)),
        grid_spec=pltpu.PrefetchScalarGridSpec(
            num_scalar_prefetch=0,
            grid=grid,
            in_specs=[data_spec, data_spec],
            out_specs=(acc_spec, acc_spec),
        ),
        compiler_params=cparams,
    )(pred2d, gt2d)

    # Pass 2: masked, normalized BerHu partial sums (c / 1/n computed in-kernel).
    sum_out = pl.pallas_call(
        functools.partial(_berhu_sum_kernel, delta=float(delta), **static),
        out_shape=jax.ShapeDtypeStruct((splits, SUBLANES, LANES), jnp.float32),
        grid_spec=pltpu.PrefetchScalarGridSpec(
            num_scalar_prefetch=0,
            grid=grid,
            in_specs=[stat_spec, stat_spec, data_spec, data_spec],
            out_specs=acc_spec,
            scratch_shapes=[pltpu.SMEM((4,), jnp.float32)],
        ),
        compiler_params=cparams,
    )(max_out, cnt_out, pred2d, gt2d)

    # Single remaining wrapper op: combine per-split / per-lane normalized partials.
    return jnp.sum(sum_out)


def _reference(prediction, gt, delta=0.05):
    err = jnp.abs(prediction - gt)
    mask = gt > MIN_DEPTH
    err_m = jnp.where(mask, err, 0.0)
    c = delta * jnp.max(err_m)
    per = jnp.where(err > c, (err * err + c * c) / (2.0 * c), err)
    per = jnp.where(mask, per, 0.0)
    return jnp.sum(per) / jnp.sum(mask.astype(jnp.float32))


if __name__ == "__main__":
    key = jax.random.PRNGKey(0)
    k1, k2 = jax.random.split(key)

    # Small NCHW depth-like inputs.
    shape = (2, 4, 16, 16)
    prediction = jax.random.uniform(k1, shape, jnp.float32, 0.0, 5.0)
    gt = jax.random.uniform(k2, shape, jnp.float32, -0.5, 5.0)
    gt = jnp.where(gt < 0.0, 0.0, gt)   # some entries <= MIN_DEPTH -> masked

    out = berhu_loss(prediction, gt)
    out = jax.block_until_ready(out)

    ref = _reference(prediction, gt)
    assert jnp.allclose(out, ref, rtol=1e-5, atol=1e-6), (out, ref)

    print("KERNEL_OK")
</pallas_src>

<mosaic_0001>
module attributes {stable_mosaic.version = 11 : i64} {
  func.func @_stats_kernel(%arg0: i32, %arg1: i32, %arg2: memref<16x128xf32, #tpu.memory_space<vmem>>, %arg3: memref<16x128xf32, #tpu.memory_space<vmem>>, %arg4: memref<1x8x128xf32, #tpu.memory_space<vmem>>, %arg5: memref<1x8x128xi32, #tpu.memory_space<vmem>>) attributes {dimension_semantics = [#tpu.dimension_semantics<parallel>, #tpu.dimension_semantics<arbitrary>], iteration_bounds = array<i64: 1, 1>, scalar_prefetch = 0 : i64, scratch_operands = 0 : i64, tpu.core_type = #tpu.core_type<tc>, window_params = [{transform_indices = @transform_0, window_bounds = array<i64: 16, 128>}, {transform_indices = @transform_1, window_bounds = array<i64: 16, 128>}, {transform_indices = @transform_2, window_bounds = array<i64: 1, 8, 128>}, {transform_indices = @transform_3, window_bounds = array<i64: 1, 8, 128>}]} {
    %c0_i32 = arith.constant 0 : i32
    %0 = arith.cmpi eq, %arg1, %c0_i32 : i32
    %1 = arith.extui %0 : i1 to i32
    %c0_i32_0 = arith.constant 0 : i32
    %2 = arith.cmpi ne, %1, %c0_i32_0 : i32
    scf.if %2 {
      %cst_19 = arith.constant 0.000000e+00 : f32
      %24 = vector.broadcast %cst_19 : f32 to vector<1x8x128xf32>
      %c0_20 = arith.constant 0 : index
      %c0_21 = arith.constant 0 : index
      %c0_22 = arith.constant 0 : index
      %25 = vector.load %arg4[%c0_20, %c0_21, %c0_22] : memref<1x8x128xf32, #tpu.memory_space<vmem>>, vector<1x8x128xf32>
      tpu.vector_store %arg4[%c0_20, %c0_21, %c0_22], %24 {strides = array<i32>} : memref<1x8x128xf32, #tpu.memory_space<vmem>>, vector<1x8x128xf32>,
      %c0_i32_23 = arith.constant 0 : i32
      %26 = vector.broadcast %c0_i32_23 : i32 to vector<1x8x128xi32>
      %c0_24 = arith.constant 0 : index
      %c0_25 = arith.constant 0 : index
      %c0_26 = arith.constant 0 : index
      %27 = vector.load %arg5[%c0_24, %c0_25, %c0_26] : memref<1x8x128xi32, #tpu.memory_space<vmem>>, vector<1x8x128xi32>
      tpu.vector_store %arg5[%c0_24, %c0_25, %c0_26], %26 {strides = array<i32>} : memref<1x8x128xi32, #tpu.memory_space<vmem>>, vector<1x8x128xi32>,
    } else {
    }
    %c0 = arith.constant 0 : index
    %c0_1 = arith.constant 0 : index
    %3 = vector.load %arg2[%c0, %c0_1] : memref<16x128xf32, #tpu.memory_space<vmem>>, vector<16x128xf32>
    %c0_2 = arith.constant 0 : index
    %c0_3 = arith.constant 0 : index
    %4 = vector.load %arg3[%c0_2, %c0_3] : memref<16x128xf32, #tpu.memory_space<vmem>>, vector<16x128xf32>
    %cst = arith.constant 1.000000e-03 : f32
    %5 = vector.broadcast %cst : f32 to vector<16x128xf32>
    %6 = arith.cmpf ogt, %4, %5 : vector<16x128xf32>
    %7 = arith.subf %3, %4 : vector<16x128xf32>
    %8 = math.absf %7 : vector<16x128xf32>
    %cst_4 = arith.constant 0.000000e+00 : f32
    %9 = vector.broadcast %cst_4 : f32 to vector<16x128xf32>
    %10 = arith.select %6, %8, %9 : vector<16x128xi1>, vector<16x128xf32>
    %11 = vector.shape_cast %10 : vector<16x128xf32> to vector<2x8x128xf32>
    %12 = arith.extui %6 : vector<16x128xi1> to vector<16x128xi32>
    %13 = vector.shape_cast %12 : vector<16x128xi32> to vector<2x8x128xi32>
    %c0_5 = arith.constant 0 : index
    %c0_6 = arith.constant 0 : index
    %c0_7 = arith.constant 0 : index
    %14 = vector.load %arg4[%c0_5, %c0_6, %c0_7] : memref<1x8x128xf32, #tpu.memory_space<vmem>>, vector<1x8x128xf32>
    %cst_8 = arith.constant dense<0xFF800000> : vector<8x128xf32>
    %15 = vector.multi_reduction <maximumf>, %11, %cst_8 [0] : vector<2x8x128xf32> to vector<8x128xf32>
    %16 = vector.shape_cast %15 : vector<8x128xf32> to vector<1x8x128xf32>
    %17 = arith.maximumf %14, %16 : vector<1x8x128xf32>
    %c0_9 = arith.constant 0 : index
    %c0_10 = arith.constant 0 : index
    %c0_11 = arith.constant 0 : index
    %18 = vector.load %arg4[%c0_9, %c0_10, %c0_11] : memref<1x8x128xf32, #tpu.memory_space<vmem>>, vector<1x8x128xf32>
    tpu.vector_store %arg4[%c0_9, %c0_10, %c0_11], %17 {strides = array<i32>} : memref<1x8x128xf32, #tpu.memory_space<vmem>>, vector<1x8x128xf32>,
    %c0_12 = arith.constant 0 : index
    %c0_13 = arith.constant 0 : index
    %c0_14 = arith.constant 0 : index
    %19 = vector.load %arg5[%c0_12, %c0_13, %c0_14] : memref<1x8x128xi32, #tpu.memory_space<vmem>>, vector<1x8x128xi32>
    %cst_15 = arith.constant dense<0> : vector<8x128xi32>
    %20 = vector.multi_reduction <add>, %13, %cst_15 [0] : vector<2x8x128xi32> to vector<8x128xi32>
    %21 = vector.shape_cast %20 : vector<8x128xi32> to vector<1x8x128xi32>
    %22 = arith.addi %19, %21 : vector<1x8x128xi32>
    %c0_16 = arith.constant 0 : index
    %c0_17 = arith.constant 0 : index
    %c0_18 = arith.constant 0 : index
    %23 = vector.load %arg5[%c0_16, %c0_17, %c0_18] : memref<1x8x128xi32, #tpu.memory_space<vmem>>, vector<1x8x128xi32>
    tpu.vector_store %arg5[%c0_16, %c0_17, %c0_18], %22 {strides = array<i32>} : memref<1x8x128xi32, #tpu.memory_space<vmem>>, vector<1x8x128xi32>,
    return
  }
  func.func @transform_0(%arg0: i32, %arg1: i32) -> (i32, i32) {
    %c1_i32 = arith.constant 1 : i32
    %0 = arith.muli %arg0, %c1_i32 : i32
    %1 = arith.addi %0, %arg1 : i32
    %c0_i32 = arith.constant 0 : i32
    %2 = arith.minsi %1, %c0_i32 : i32
    %c0_i32_0 = arith.constant 0 : i32
    %c0_i32_1 = arith.constant 0 : i32
    return %2, %c0_i32_0 : i32, i32
  }
  func.func @transform_1(%arg0: i32, %arg1: i32) -> (i32, i32) {
    %c1_i32 = arith.constant 1 : i32
    %0 = arith.muli %arg0, %c1_i32 : i32
    %1 = arith.addi %0, %arg1 : i32
    %c0_i32 = arith.constant 0 : i32
    %2 = arith.minsi %1, %c0_i32 : i32
    %c0_i32_0 = arith.constant 0 : i32
    %c0_i32_1 = arith.constant 0 : i32
    return %2, %c0_i32_0 : i32, i32
  }
  func.func @transform_2(%arg0: i32, %arg1: i32) -> (i32, i32, i32) {
    %c0_i32 = arith.constant 0 : i32
    %c0_i32_0 = arith.constant 0 : i32
    %c0_i32_1 = arith.constant 0 : i32
    return %arg0, %c0_i32, %c0_i32_0 : i32, i32, i32
  }
  func.func @transform_3(%arg0: i32, %arg1: i32) -> (i32, i32, i32) {
    %c0_i32 = arith.constant 0 : i32
    %c0_i32_0 = arith.constant 0 : i32
    %c0_i32_1 = arith.constant 0 : i32
    return %arg0, %c0_i32, %c0_i32_0 : i32, i32, i32
  }
}

</mosaic_0001>

<llo_original>
// kernel: tpu_custom_call.1
$region0: #{tpu_custom_call.1}
  #allocation0 [shape = 'u32[]', space=smem, size = 0x4, offset = 0x4, fixed_abs, tag = 'smem constant byte address 0x4 - core index']
  #allocation1 [shape = 'u32[72,128]{1,0:T(1,128)}', space=vmem, size = 0x9000, scoped, tag = 'internal scratch']
  %s0 = inlined_call_operand.hbm [shape: f32[16,128], index: 0, kind: input, shape index: {}]
  %s1 = inlined_call_operand.hbm [shape: f32[16,128], index: 1, kind: input, shape index: {}]
  %s2 = inlined_call_operand.hbm [shape: f32[1,8,128], index: 2, kind: output, shape index: {0}]
  %s3 = inlined_call_operand.hbm [shape: s32[1,8,128], index: 3, kind: output, shape index: {1}]
  %4 = xla_tuple %s2, %s3
  %s5 = sld [smem:[#allocation0]]
  $region38: #{tpu_custom_call.1} parent=0
    _
  %s7 = ssub.s32 1, %s5
  %s8 = scalar_select 0, %s7, %s5
  $region1: #{tpu_custom_call.1} parent=0
    #allocation2 [shape = 'u8[8192]{0}', space=vmem, size = 0x2000, scoped, tag = 'input window, operand 0, single buffered']
    #allocation3 [shape = 's32[1]{0}', space=sflag, size = 0x4, scoped, tag = 'scoped memory for tpu_custom_call.1']
    #allocation4 [shape = 's32[1]{0}', space=sflag, size = 0x4, scoped, tag = 'scoped memory for tpu_custom_call.1']
    #allocation5 [shape = 'u8[8192]{0}', space=vmem, size = 0x2000, scoped, tag = 'input window, operand 1, single buffered']
    #allocation6 [shape = 's32[1]{0}', space=sflag, size = 0x4, scoped, tag = 'scoped memory for tpu_custom_call.1']
    #allocation7 [shape = 'u8[4096]{0}', space=vmem, size = 0x1000, scoped, tag = 'output window, operand 0, single buffered']
    #allocation8 [shape = 'u8[4096]{0}', space=vmem, size = 0x1000, scoped, tag = 'output window, operand 1, single buffered']
    #allocation9 [shape = 's32[1]{0}', space=sflag, size = 0x4, scoped, tag = 'scoped memory for tpu_custom_call.1']
    %9 = vsyncpa [#allocation3], 0
    %10 = vsyncpa [#allocation6], 0
    %11 = vsyncpa [#allocation4], 0
    %12 = vsyncpa [#allocation9], 0
    // Predicated region
    $region2: #{tpu_custom_call.1} parent=1 // pred_check
      _
    $region3: #{tpu_custom_call.1} parent=1 // pred_check_branch
      %14 = sbr.rel (0) target = $region5
    $region4: #{tpu_custom_call.1} parent=1 // pred_region
      %s15 = sadd.s32 0, 0
      %p16 = scmp.lt.s32.totalorder %s15, 0
      %s17 = scalar_select %p16, %s15, 0
      %s18 = smul.u32 2, %s17
      %20 = vsyncadd [#allocation3], 0
      %s21 = smul.addr %s18, 8
      %s22 = scalar_lea.hbm %s0, %s21
      %s23 = sshll.u32 %s22, 4
      %s24 = int_to_ptr.hbm [resolvable:$true] %s23
      %s25 = sshll.u32 [#allocation2], 4
      %s26 = int_to_ptr.vmem [resolvable:$true] %s25
      %31 = dma.hbm_to_vmem [thread:$0]  %s24, 256, %s26, [#allocation3], 128, 128, 8
    $region5: #{tpu_custom_call.1} parent=1 // pred_fallthru
      _
    // Predicated region
    $region6: #{tpu_custom_call.1} parent=1 // pred_check
      _
    $region7: #{tpu_custom_call.1} parent=1 // pred_check_branch
      %33 = sbr.rel (0) target = $region9
    $region8: #{tpu_custom_call.1} parent=1 // pred_region
      %s34 = sadd.s32 0, 0
      %p35 = scmp.lt.s32.totalorder %s34, 0
      %s36 = scalar_select %p35, %s34, 0
      %s37 = smul.u32 2, %s36
      %39 = vsyncadd [#allocation6], 0
      %s40 = smul.addr %s37, 8
      %s41 = scalar_lea.hbm %s1, %s40
      %s42 = sshll.u32 %s41, 4
      %s43 = int_to_ptr.hbm [resolvable:$true] %s42
      %s44 = sshll.u32 [#allocation5], 4
      %s45 = int_to_ptr.vmem [resolvable:$true] %s44
      %50 = dma.hbm_to_vmem [thread:$0]  %s43, 256, %s45, [#allocation6], 128, 128, 8
    $region9: #{tpu_custom_call.1} parent=1 // pred_fallthru
      _
    // Predicated region
    $region10: #{tpu_custom_call.1} parent=1 // pred_check
      _
    $region11: #{tpu_custom_call.1} parent=1 // pred_check_branch
      %52 = sbr.rel (0) target = $region13
    $region12: #{tpu_custom_call.1} parent=1 // pred_region
      %54 = dma.done [#allocation3], 256
    $region13: #{tpu_custom_call.1} parent=1 // pred_fallthru
      _
    // Predicated region
    $region14: #{tpu_custom_call.1} parent=1 // pred_check
      _
    $region15: #{tpu_custom_call.1} parent=1 // pred_check_branch
      %56 = sbr.rel (0) target = $region17
    $region16: #{tpu_custom_call.1} parent=1 // pred_region
      %58 = dma.done [#allocation6], 256
    $region17: #{tpu_custom_call.1} parent=1 // pred_fallthru
      _
    %s59 = sadd.s32 0, 0
    %p60 = scmp.lt.s32.totalorder %s59, 0
    %s61 = scalar_select %p60, %s59, 0
    %s62 = smul.u32 2, %s61
    %s63 = sadd.s32 0, 0
    %p64 = scmp.lt.s32.totalorder %s63, 0
    %s65 = scalar_select %p64, %s63, 0
    %s66 = smul.u32 2, %s65
    %p67 = scmp.eq.s32.totalorder 0, 0
    // Predicated region
    $region18: #{tpu_custom_call.1} parent=1 // pred_check
      %p68 = pneg %p67
    $region19: #{tpu_custom_call.1} parent=1 // pred_check_branch
      %70 = sbr.rel (%p68) target = $region21
    $region20: #{tpu_custom_call.1} parent=1 // pred_region
      %71 = vst [vmem:[#allocation7] sm:$0xff] 0.0
      %72 = vst [vmem:[#allocation8] sm:$0xff] 0
    $region21: #{tpu_custom_call.1} parent=1 // pred_fallthru
      _
    %v73 = vld [vmem:[#allocation2] sm:$0xff]
    %v74 = vld [vmem:[#allocation2 + $0x8] sm:$0xff]
    %v75 = vld [vmem:[#allocation5] sm:$0xff]
    %v76 = vld [vmem:[#allocation5 + $0x8] sm:$0xff]
    %vm77 = vcmp.gt.f32.partialorder %v75, 0.001
    %vm78 = vcmp.gt.f32.partialorder %v76, 0.001
    %v79 = vsub.f32 %v73, %v75
    %v80 = vsub.f32 %v74, %v76
    %v81 = vand.u32 2147483647, %v79
    %v82 = vand.u32 2147483647, %v80
    %v83 = vsel %vm77, %v81, 0.0
    %v84 = vsel %vm78, %v82, 0.0
    %v85 = vsel %vm77, 1, 0
    %v86 = vsel %vm78, 1, 0
    %v87 = vld [vmem:[#allocation7] sm:$0xff]
    %v88 = vmax.f32 %v83, %v84
    %v89 = vmax.f32 %v87, %v88
    %90 = vst [vmem:[#allocation7] sm:$0xff] %v89
    %v91 = vld [vmem:[#allocation8] sm:$0xff]
    %v92 = vadd.s32 %v85, %v86
    %v93 = vadd.s32 %v91, %v92
    %94 = vst [vmem:[#allocation8] sm:$0xff] %v93
    // Predicated region
    $region22: #{tpu_custom_call.1} parent=1 // pred_check
      _
    $region23: #{tpu_custom_call.1} parent=1 // pred_check_branch
      %96 = sbr.rel (0) target = $region25
    $region24: #{tpu_custom_call.1} parent=1 // pred_region
      %98 = vsyncadd [#allocation4], 0
      %s100 = sshll.u32 [#allocation7], 4
      %s101 = int_to_ptr.vmem [resolvable:$true] %s100
      %s102 = sshll.u32 %s2, 4
      %s103 = int_to_ptr.hbm [resolvable:$true] %s102
      %105 = dma.vmem_to_hbm [thread:$0]  %s101, 128, %s103, [#allocation4]
    $region25: #{tpu_custom_call.1} parent=1 // pred_fallthru
      _
    // Predicated region
    $region26: #{tpu_custom_call.1} parent=1 // pred_check
      _
    $region27: #{tpu_custom_call.1} parent=1 // pred_check_branch
      %107 = sbr.rel (0) target = $region29
    $region28: #{tpu_custom_call.1} parent=1 // pred_region
      %109 = vsyncadd [#allocation9], 0
      %s111 = sshll.u32 [#allocation8], 4
      %s112 = int_to_ptr.vmem [resolvable:$true] %s111
      %s113 = sshll.u32 %s3, 4
      %s114 = int_to_ptr.hbm [resolvable:$true] %s113
      %116 = dma.vmem_to_hbm [thread:$0]  %s112, 128, %s114, [#allocation9]
    $region29: #{tpu_custom_call.1} parent=1 // pred_fallthru
      _
    // Predicated region
    $region30: #{tpu_custom_call.1} parent=1 // pred_check
      _
    $region31: #{tpu_custom_call.1} parent=1 // pred_check_branch
      %118 = sbr.rel (0) target = $region33
    $region32: #{tpu_custom_call.1} parent=1 // pred_region
      %120 = dma.done [#allocation4], 128
    $region33: #{tpu_custom_call.1} parent=1 // pred_fallthru
      _
    // Predicated region
    $region34: #{tpu_custom_call.1} parent=1 // pred_check
      _
    $region35: #{tpu_custom_call.1} parent=1 // pred_check_branch
      %122 = sbr.rel (0) target = $region37
    $region36: #{tpu_custom_call.1} parent=1 // pred_region
      %124 = dma.done [#allocation9], 128
    $region37: #{tpu_custom_call.1} parent=1 // pred_fallthru
      _
    %125 = vsyncpa [#allocation3], 1
    %126 = vsyncpa [#allocation6], 1
    %127 = vsyncpa [#allocation4], 1
    %128 = vsyncpa [#allocation9], 1

</llo_original>
